<compile_context>
chip_gen: v6e
topology: v6e:2x2x1
jax: 0.10.0
libtpu: 0.0.40
codegen_flags: <defaults>
</compile_context>

<pallas_src>
import functools

import jax
import jax.numpy as jnp
from jax.experimental import pallas as pl
from jax.experimental.pallas import tpu as pltpu

_N = 16  # samples packed per 128-lane slab row (128 lanes / 8 features)


def _pima_kernel(x_ref, w1_ref, b1_ref, w2_ref, b2_ref, w3_ref, b3_ref, o_ref):
    x = x_ref[...].astype(jnp.float32)                               # (TRB, 128)

    # hidden1 + ReLU: (TRB, 128) @ (128, 192) -> (TRB, 192)
    h1 = jnp.dot(x, w1_ref[...], preferred_element_type=jnp.float32) + b1_ref[...]
    h1 = jnp.maximum(h1, 0.0)

    # hidden2 + ReLU: (TRB, 192) @ (192, 128) -> (TRB, 128)
    h2 = jnp.dot(h1, w2_ref[...], preferred_element_type=jnp.float32) + b2_ref[...]
    h2 = jnp.maximum(h2, 0.0)

    # output + exact Sigmoid: (TRB, 128) @ (128, 16) -> (TRB, 16)
    z = jnp.dot(h2, w3_ref[...], preferred_element_type=jnp.float32) + b3_ref[...]
    o_ref[...] = 1.0 / (1.0 + jnp.exp(-z))


def _expand_blockdiag_T(w, n=_N):
    """(out, in) PyTorch-Linear weight -> transposed block-diagonal (n*in, n*out)."""
    out_f, in_f = w.shape
    eye = jnp.eye(n, dtype=w.dtype)
    we = (eye[:, None, :, None] * w[None, :, None, :]).reshape(n * out_f, n * in_f)
    return we.T


@functools.partial(jax.jit, static_argnames=("block_rows",))
def pima_forward(x, params, *, block_rows=4096):
    """x: (B, 8) float32 (PyTorch nn.Linear input layout). Returns (B, 1) float32."""
    w1, b1 = params["w1"], params["b1"]   # (12, 8), (12, 1)
    w2, b2 = params["w2"], params["b2"]   # (8, 12), (8, 1)
    w3, b3 = params["w3"], params["b3"]   # (1, 8),  (1, 1)

    B = x.shape[0]
    rem = (-B) % _N
    if rem:  # only the tiny <16-sample remainder is ever padded
        x = jnp.pad(x, ((0, rem), (0, 0)))
    R = (B + rem) // _N
    x_slab = x.reshape(R, _N * 8)          # free contiguous reshape -> (R, 128)

    # Expanded (block-diagonal, pre-transposed) weights & tiled biases; tiny.
    w1t = _expand_blockdiag_T(w1)          # (128, 192)
    w2t = _expand_blockdiag_T(w2)          # (192, 128)
    w3t = _expand_blockdiag_T(w3)          # (128, 16)
    b1e = jnp.tile(b1.reshape(1, -1), (1, _N))   # (1, 192)
    b2e = jnp.tile(b2.reshape(1, -1), (1, _N))   # (1, 128)
    b3e = jnp.tile(b3.reshape(1, -1), (1, _N))   # (1, 16)

    trb = min(block_rows, R)
    grid = (pl.cdiv(R, trb),)
    resident = lambda a: pl.BlockSpec(a.shape, lambda i: (0, 0))  # fetched once

    out = pl.pallas_call(
        _pima_kernel,
        out_shape=jax.ShapeDtypeStruct((R, _N), jnp.float32),
        grid=grid,
        in_specs=[
            pl.BlockSpec((trb, _N * 8), lambda i: (i, 0)),   # x slab, pipelined
            resident(w1t), resident(b1e),
            resident(w2t), resident(b2e),
            resident(w3t), resident(b3e),
        ],
        out_specs=pl.BlockSpec((trb, _N), lambda i: (i, 0)),
        compiler_params=pltpu.CompilerParams(
            dimension_semantics=("parallel",),       # megacore / v7x 2-TC sharding
            vmem_limit_bytes=40 * 1024 * 1024,
        ),
    )(x_slab, w1t, b1e, w2t, b2e, w3t, b3e)

    # (R, 16) -> (R*16, 1) is a free row-major reshape; drop the remainder pad.
    return out.reshape(-1, 1)[:B]


def init_params(key):
    """PyTorch nn.Linear layout: W (out, in), b (out, 1), U(-1/sqrt(in), 1/sqrt(in))."""
    ks = jax.random.split(key, 6)

    def linear(kw, kb, fan_in, fan_out):
        bound = 1.0 / jnp.sqrt(jnp.float32(fan_in))
        w = jax.random.uniform(kw, (fan_out, fan_in), jnp.float32, -bound, bound)
        b = jax.random.uniform(kb, (fan_out, 1), jnp.float32, -bound, bound)
        return w, b

    w1, b1 = linear(ks[0], ks[1], 8, 12)
    w2, b2 = linear(ks[2], ks[3], 12, 8)
    w3, b3 = linear(ks[4], ks[5], 8, 1)
    return {"w1": w1, "b1": b1, "w2": w2, "b2": b2, "w3": w3, "b3": b3}


def reference_forward(x, p):
    hp = jax.lax.Precision.HIGHEST
    h1 = jnp.maximum(jnp.dot(x, p["w1"].T, precision=hp) + p["b1"].T, 0.0)
    h2 = jnp.maximum(jnp.dot(h1, p["w2"].T, precision=hp) + p["b2"].T, 0.0)
    return jax.nn.sigmoid(jnp.dot(h2, p["w3"].T, precision=hp) + p["b3"].T)


if __name__ == "__main__":
    key = jax.random.PRNGKey(0)
    kx, kp = jax.random.split(key)

    B = 200  # deliberately NOT a multiple of 16: exercises the remainder path
    x = jax.random.normal(kx, (B, 8), dtype=jnp.float32)
    params = init_params(kp)

    ref = reference_forward(x, params)

    # Single-block path.
    out = jax.block_until_ready(pima_forward(x, params))
    assert out.shape == (B, 1)
    assert jnp.allclose(out, ref, atol=1e-5, rtol=1e-5), float(jnp.max(jnp.abs(out - ref)))

    # Multi-step grid with a ragged last block (R=13 rows, 8-row tiles -> 2 steps).
    out2 = jax.block_until_ready(pima_forward(x, params, block_rows=8))
    assert jnp.allclose(out2, ref, atol=1e-5, rtol=1e-5), float(jnp.max(jnp.abs(out2 - ref)))

    print("KERNEL_OK")
</pallas_src>

<mosaic_0001>
module attributes {stable_mosaic.version = 11 : i64} {
  func.func @_pima_kernel(%arg0: i32, %arg1: memref<13x128xf32, #tpu.memory_space<vmem>>, %arg2: memref<128x192xf32, #tpu.memory_space<vmem>>, %arg3: memref<1x192xf32, #tpu.memory_space<vmem>>, %arg4: memref<192x128xf32, #tpu.memory_space<vmem>>, %arg5: memref<1x128xf32, #tpu.memory_space<vmem>>, %arg6: memref<128x16xf32, #tpu.memory_space<vmem>>, %arg7: memref<1x16xf32, #tpu.memory_space<vmem>>, %arg8: memref<13x16xf32, #tpu.memory_space<vmem>>) attributes {dimension_semantics = [#tpu.dimension_semantics<parallel>], iteration_bounds = array<i64: 1>, scalar_prefetch = 0 : i64, scratch_operands = 0 : i64, tpu.core_type = #tpu.core_type<tc>, window_params = [{transform_indices = @transform_0, window_bounds = array<i64: 13, 128>}, {pipeline_mode = #tpu.pipeline_mode<synchronous>, transform_indices = @transform_1, window_bounds = array<i64: 128, 192>}, {pipeline_mode = #tpu.pipeline_mode<synchronous>, transform_indices = @transform_2, window_bounds = array<i64: 1, 192>}, {pipeline_mode = #tpu.pipeline_mode<synchronous>, transform_indices = @transform_3, window_bounds = array<i64: 192, 128>}, {pipeline_mode = #tpu.pipeline_mode<synchronous>, transform_indices = @transform_4, window_bounds = array<i64: 1, 128>}, {pipeline_mode = #tpu.pipeline_mode<synchronous>, transform_indices = @transform_5, window_bounds = array<i64: 128, 16>}, {pipeline_mode = #tpu.pipeline_mode<synchronous>, transform_indices = @transform_6, window_bounds = array<i64: 1, 16>}, {transform_indices = @transform_7, window_bounds = array<i64: 13, 16>}]} {
    %c0 = arith.constant 0 : index
    %c0_0 = arith.constant 0 : index
    %0 = vector.load %arg1[%c0, %c0_0] : memref<13x128xf32, #tpu.memory_space<vmem>>, vector<13x128xf32>
    %c0_1 = arith.constant 0 : index
    %c0_2 = arith.constant 0 : index
    %1 = vector.load %arg2[%c0_1, %c0_2] : memref<128x192xf32, #tpu.memory_space<vmem>>, vector<128x192xf32>
    %cst = arith.constant dense<0.000000e+00> : vector<13x192xf32>
    %2 = tpu.matmul %0, %1, %cst {dimension_numbers = #tpu.dot_dimension_numbers<[1], [0], [0], [1], [0, 0, 1, 1], [], []>} : vector<13x128xf32>, vector<128x192xf32>, vector<13x192xf32> -> vector<13x192xf32>
    %c0_3 = arith.constant 0 : index
    %c0_4 = arith.constant 0 : index
    %3 = vector.load %arg3[%c0_3, %c0_4] : memref<1x192xf32, #tpu.memory_space<vmem>>, vector<1x192xf32>
    %4 = vector.broadcast %3 : vector<1x192xf32> to vector<13x192xf32>
    %5 = arith.addf %2, %4 : vector<13x192xf32>
    %cst_5 = arith.constant 0.000000e+00 : f32
    %6 = vector.broadcast %cst_5 : f32 to vector<13x192xf32>
    %7 = arith.maximumf %5, %6 : vector<13x192xf32>
    %c0_6 = arith.constant 0 : index
    %c0_7 = arith.constant 0 : index
    %8 = vector.load %arg4[%c0_6, %c0_7] : memref<192x128xf32, #tpu.memory_space<vmem>>, vector<192x128xf32>
    %cst_8 = arith.constant dense<0.000000e+00> : vector<13x128xf32>
    %9 = tpu.matmul %7, %8, %cst_8 {dimension_numbers = #tpu.dot_dimension_numbers<[1], [0], [0], [1], [0, 0, 1, 1], [], []>} : vector<13x192xf32>, vector<192x128xf32>, vector<13x128xf32> -> vector<13x128xf32>
    %c0_9 = arith.constant 0 : index
    %c0_10 = arith.constant 0 : index
    %10 = vector.load %arg5[%c0_9, %c0_10] : memref<1x128xf32, #tpu.memory_space<vmem>>, vector<1x128xf32>
    %11 = vector.broadcast %10 : vector<1x128xf32> to vector<13x128xf32>
    %12 = arith.addf %9, %11 : vector<13x128xf32>
    %cst_11 = arith.constant 0.000000e+00 : f32
    %13 = vector.broadcast %cst_11 : f32 to vector<13x128xf32>
    %14 = arith.maximumf %12, %13 : vector<13x128xf32>
    %c0_12 = arith.constant 0 : index
    %c0_13 = arith.constant 0 : index
    %15 = vector.load %arg6[%c0_12, %c0_13] : memref<128x16xf32, #tpu.memory_space<vmem>>, vector<128x16xf32>
    %cst_14 = arith.constant dense<0.000000e+00> : vector<13x16xf32>
    %16 = tpu.matmul %14, %15, %cst_14 {dimension_numbers = #tpu.dot_dimension_numbers<[1], [0], [0], [1], [0, 0, 1, 1], [], []>} : vector<13x128xf32>, vector<128x16xf32>, vector<13x16xf32> -> vector<13x16xf32>
    %c0_15 = arith.constant 0 : index
    %c0_16 = arith.constant 0 : index
    %17 = vector.load %arg7[%c0_15, %c0_16] : memref<1x16xf32, #tpu.memory_space<vmem>>, vector<1x16xf32>
    %18 = vector.broadcast %17 : vector<1x16xf32> to vector<13x16xf32>
    %19 = arith.addf %16, %18 : vector<13x16xf32>
    %cst_17 = arith.constant 0.000000e+00 : f32
    %20 = vector.broadcast %cst_17 : f32 to vector<13x16xf32>
    %21 = arith.subf %20, %19 : vector<13x16xf32>
    %22 = math.exp %21 : vector<13x16xf32>
    %cst_18 = arith.constant 1.000000e+00 : f32
    %23 = vector.broadcast %cst_18 : f32 to vector<13x16xf32>
    %24 = arith.addf %23, %22 : vector<13x16xf32>
    %cst_19 = arith.constant 1.000000e+00 : f32
    %25 = vector.broadcast %cst_19 : f32 to vector<13x16xf32>
    %26 = arith.divf %25, %24 : vector<13x16xf32>
    %c0_20 = arith.constant 0 : index
    %c0_21 = arith.constant 0 : index
    %27 = vector.load %arg8[%c0_20, %c0_21] : memref<13x16xf32, #tpu.memory_space<vmem>>, vector<13x16xf32>
    tpu.vector_store %arg8[%c0_20, %c0_21], %26 {strides = array<i32>} : memref<13x16xf32, #tpu.memory_space<vmem>>, vector<13x16xf32>,
    return
  }
  func.func @transform_0(%arg0: i32) -> (i32, i32) {
    %c0_i32 = arith.constant 0 : i32
    %c0_i32_0 = arith.constant 0 : i32
    return %arg0, %c0_i32 : i32, i32
  }
  func.func @transform_1(%arg0: i32) -> (i32, i32) {
    %c0_i32 = arith.constant 0 : i32
    %c0_i32_0 = arith.constant 0 : i32
    %c0_i32_1 = arith.constant 0 : i32
    return %c0_i32, %c0_i32_0 : i32, i32
  }
  func.func @transform_2(%arg0: i32) -> (i32, i32) {
    %c0_i32 = arith.constant 0 : i32
    %c0_i32_0 = arith.constant 0 : i32
    %c0_i32_1 = arith.constant 0 : i32
    return %c0_i32, %c0_i32_0 : i32, i32
  }
  func.func @transform_3(%arg0: i32) -> (i32, i32) {
    %c0_i32 = arith.constant 0 : i32
    %c0_i32_0 = arith.constant 0 : i32
    %c0_i32_1 = arith.constant 0 : i32
    return %c0_i32, %c0_i32_0 : i32, i32
  }
  func.func @transform_4(%arg0: i32) -> (i32, i32) {
    %c0_i32 = arith.constant 0 : i32
    %c0_i32_0 = arith.constant 0 : i32
    %c0_i32_1 = arith.constant 0 : i32
    return %c0_i32, %c0_i32_0 : i32, i32
  }
  func.func @transform_5(%arg0: i32) -> (i32, i32) {
    %c0_i32 = arith.constant 0 : i32
    %c0_i32_0 = arith.constant 0 : i32
    %c0_i32_1 = arith.constant 0 : i32
    return %c0_i32, %c0_i32_0 : i32, i32
  }
  func.func @transform_6(%arg0: i32) -> (i32, i32) {
    %c0_i32 = arith.constant 0 : i32
    %c0_i32_0 = arith.constant 0 : i32
    %c0_i32_1 = arith.constant 0 : i32
    return %c0_i32, %c0_i32_0 : i32, i32
  }
  func.func @transform_7(%arg0: i32) -> (i32, i32) {
    %c0_i32 = arith.constant 0 : i32
    %c0_i32_0 = arith.constant 0 : i32
    return %arg0, %c0_i32 : i32, i32
  }
}

</mosaic_0001>

<llo_original>
// kernel: pima_forward.1
$region0: #{pima_forward.1}
  #allocation0 [shape = 'u32[]', space=smem, size = 0x4, offset = 0x4, fixed_abs, tag = 'smem constant byte address 0x4 - core index']
  #allocation1 [shape = 'u32[144,128]{1,0:T(1,128)}', space=vmem, size = 0x12000, scoped, tag = 'internal scratch']
  %s0 = inlined_call_operand.vmem [shape: f32[13,128], index: 0, kind: input, shape index: {}]
  %s1 = inlined_call_operand.vmem [shape: f32[128,192], index: 1, kind: input, shape index: {}]
  %s2 = inlined_call_operand.vmem [shape: f32[1,192], index: 2, kind: input, shape index: {}]
  %s3 = inlined_call_operand.vmem [shape: f32[192,128], index: 3, kind: input, shape index: {}]
  %s4 = inlined_call_operand.vmem [shape: f32[1,128], index: 4, kind: input, shape index: {}]
  %s5 = inlined_call_operand.vmem [shape: f32[128,16], index: 5, kind: input, shape index: {}]
  %s6 = inlined_call_operand.vmem [shape: f32[1,16], index: 6, kind: input, shape index: {}]
  %s7 = inlined_call_operand.vmem [shape: f32[13,16], index: 7, kind: output, shape index: {}]
  %s8 = sld [smem:[#allocation0]]
  $region38: #{pima_forward.1} parent=0
    _
  %s10 = ssub.s32 1, %s8
  %s11 = scalar_select 0, %s10, %s8
  // Predicated region
  $region2: #{pima_forward.1} parent=0 // pred_check
    _
  $region3: #{pima_forward.1} parent=0 // pred_check_branch
    %13 = sbr.rel (0) target = $region5
  $region4: #{pima_forward.1} parent=0 // pred_region
    _
  $region5: #{pima_forward.1} parent=0 // pred_fallthru
    _
  // Predicated region
  $region6: #{pima_forward.1} parent=0 // pred_check
    _
  $region7: #{pima_forward.1} parent=0 // pred_check_branch
    %15 = sbr.rel (0) target = $region9
  $region8: #{pima_forward.1} parent=0 // pred_region
    _
  $region9: #{pima_forward.1} parent=0 // pred_fallthru
    _
  // Predicated region
  $region10: #{pima_forward.1} parent=0 // pred_check
    _
  $region11: #{pima_forward.1} parent=0 // pred_check_branch
    %17 = sbr.rel (0) target = $region13
  $region12: #{pima_forward.1} parent=0 // pred_region
    _
  $region13: #{pima_forward.1} parent=0 // pred_fallthru
    _
  // Predicated region
  $region14: #{pima_forward.1} parent=0 // pred_check
    _
  $region15: #{pima_forward.1} parent=0 // pred_check_branch
    %19 = sbr.rel (0) target = $region17
  $region16: #{pima_forward.1} parent=0 // pred_region
    _
  $region17: #{pima_forward.1} parent=0 // pred_fallthru
    _
  // Predicated region
  $region18: #{pima_forward.1} parent=0 // pred_check
    _
  $region19: #{pima_forward.1} parent=0 // pred_check_branch
    %21 = sbr.rel (0) target = $region21
  $region20: #{pima_forward.1} parent=0 // pred_region
    _
  $region21: #{pima_forward.1} parent=0 // pred_fallthru
    _
  // Predicated region
  $region22: #{pima_forward.1} parent=0 // pred_check
    _
  $region23: #{pima_forward.1} parent=0 // pred_check_branch
    %23 = sbr.rel (0) target = $region25
  $region24: #{pima_forward.1} parent=0 // pred_region
    _
  $region25: #{pima_forward.1} parent=0 // pred_fallthru
    _
  // Predicated region
  $region26: #{pima_forward.1} parent=0 // pred_check
    _
  $region27: #{pima_forward.1} parent=0 // pred_check_branch
    %25 = sbr.rel (0) target = $region29
  $region28: #{pima_forward.1} parent=0 // pred_region
    _
  $region29: #{pima_forward.1} parent=0 // pred_fallthru
    _
  %v26 = vld [vmem:[%s0] sm:$0xff]
  %v27 = vld [vmem:[%s0 + $0x8] sm:$0x1f]
  %v28 = vld [vmem:[%s1] sm:$0xff]
  %v29 = vld [vmem:[%s1 + $0x8] sm:$0xff]
  %v30 = vld [vmem:[%s1 + $0x10] sm:$0xff]
  %v31 = vld [vmem:[%s1 + $0x18] sm:$0xff]
  %v32 = vld [vmem:[%s1 + $0x20] sm:$0xff]
  %v33 = vld [vmem:[%s1 + $0x28] sm:$0xff]
  %v34 = vld [vmem:[%s1 + $0x30] sm:$0xff]
  %v35 = vld [vmem:[%s1 + $0x38] sm:$0xff]
  %v36 = vld [vmem:[%s1 + $0x40] sm:$0xff]
  %v37 = vld [vmem:[%s1 + $0x48] sm:$0xff]
  %v38 = vld [vmem:[%s1 + $0x50] sm:$0xff]
  %v39 = vld [vmem:[%s1 + $0x58] sm:$0xff]
  %v40 = vld [vmem:[%s1 + $0x60] sm:$0xff]
  %v41 = vld [vmem:[%s1 + $0x68] sm:$0xff]
  %v42 = vld [vmem:[%s1 + $0x70] sm:$0xff]
  %v43 = vld [vmem:[%s1 + $0x78] sm:$0xff]
  %v44 = vld [vmem:[%s1 + $0x80] sm:$0xff]
  %v45 = vld [vmem:[%s1 + $0x88] sm:$0xff]
  %v46 = vld [vmem:[%s1 + $0x90] sm:$0xff]
  %v47 = vld [vmem:[%s1 + $0x98] sm:$0xff]
  %v48 = vld [vmem:[%s1 + $0xa0] sm:$0xff]
  %v49 = vld [vmem:[%s1 + $0xa8] sm:$0xff]
  %v50 = vld [vmem:[%s1 + $0xb0] sm:$0xff]
  %v51 = vld [vmem:[%s1 + $0xb8] sm:$0xff]
  %v52 = vld [vmem:[%s1 + $0xc0] sm:$0xff]
  %v53 = vld [vmem:[%s1 + $0xc8] sm:$0xff]
  %v54 = vld [vmem:[%s1 + $0xd0] sm:$0xff]
  %v55 = vld [vmem:[%s1 + $0xd8] sm:$0xff]
  %v56 = vld [vmem:[%s1 + $0xe0] sm:$0xff]
  %v57 = vld [vmem:[%s1 + $0xe8] sm:$0xff]
  %v58 = vld [vmem:[%s1 + $0xf0] sm:$0xff]
  %v59 = vld [vmem:[%s1 + $0xf8] sm:$0xff]
  %v60 = vld [vmem:[%s2] sm:$0x3]
  %v62 = vlaneseq
  %v63 = vshrl.u32 %v62, 7
  %v64 = vsub.s32 0, %v63
  %v65 = vrot.slane %v60, %v64
  %v66 = vlaneseq
  %v67 = vshrl.u32 %v66, 7
  %v68 = vsub.s32 1, %v67
  %v69 = vrot.slane %v60, %v68
  %72 = vmatprep.subr.mxu0 %v59
  %73 = vmatpush1.msra.mxu0 %v58
  %74 = vmatprep.subr.mxu0 %v57
  %75 = vmatpush1.msra.mxu0 %v56
  %76 = vmatprep.subr.mxu0 %v55
  %77 = vmatpush1.msra.mxu0 %v54
  %78 = vmatprep.subr.mxu0 %v53
  %79 = vmatpush1.msra.mxu0 %v52
  %80 = vmatprep.subr.mxu0 %v51
  %81 = vmatpush1.msra.mxu0 %v50
  %82 = vmatprep.subr.mxu0 %v49
  %83 = vmatpush1.msra.mxu0 %v48
  %84 = vmatprep.subr.mxu0 %v47
  %85 = vmatpush1.msra.mxu0 %v46
  %86 = vmatprep.subr.mxu0 %v45
  %87 = vmatpush1.msra.mxu0 %v44
  %88 = vmatprep.subr.mxu0 %v43
  %89 = vmatpush1.msra.mxu0 %v42
  %90 = vmatprep.subr.mxu0 %v41
  %91 = vmatpush1.msra.mxu0 %v40
  %92 = vmatprep.subr.mxu0 %v39
  %93 = vmatpush1.msra.mxu0 %v38
  %94 = vmatprep.subr.mxu0 %v37
  %95 = vmatpush1.msra.mxu0 %v36
  %96 = vmatprep.subr.mxu0 %v35
  %97 = vmatpush1.msra.mxu0 %v34
  %98 = vmatprep.subr.mxu0 %v33
  %99 = vmatpush1.msra.mxu0 %v32
  %100 = vmatprep.subr.mxu0 %v31
  %101 = vmatpush1.msra.mxu0 %v30
  %102 = vmatprep.subr.mxu0 %v29
  %103 = vmatpush1.msra.mxu0 %v28
  %104 = vmatprep.subr.mxu0 0.0
  %105 = vmatpush2.msra.mxu0 0.0
  %106 = vmatprep.subr.mxu0 0.0
  %107 = vmatpush2.msra.mxu0 0.0
  %108 = vmatprep.subr.mxu0 0.0
  %109 = vmatpush2.msra.mxu0 0.0
  %110 = vmatprep.subr.mxu0 0.0
  %111 = vmatpush2.msra.mxu0 0.0
  %112 = vmatprep.subr.mxu0 0.0
  %113 = vmatpush2.msra.mxu0 0.0
  %114 = vmatprep.subr.mxu0 0.0
  %115 = vmatpush2.msra.mxu0 0.0
  %116 = vmatprep.subr.mxu0 0.0
  %117 = vmatpush2.msra.mxu0 0.0
  %118 = vmatprep.subr.mxu0 0.0
  %119 = vmatpush2.msra.mxu0 0.0
  %120 = vmatprep.subr.mxu0 0.0
  %121 = vmatpush2.msra.mxu0 0.0
  %122 = vmatprep.subr.mxu0 0.0
  %123 = vmatpush2.msra.mxu0 0.0
  %124 = vmatprep.subr.mxu0 0.0
  %125 = vmatpush2.msra.mxu0 0.0
  %126 = vmatprep.subr.mxu0 0.0
  %127 = vmatpush2.msra.mxu0 0.0
  %128 = vmatprep.subr.mxu0 0.0
  %129 = vmatpush2.msra.mxu0 0.0
  %130 = vmatprep.subr.mxu0 0.0
  %131 = vmatpush2.msra.mxu0 0.0
  %132 = vmatprep.subr.mxu0 0.0
  %133 = vmatpush2.msra.mxu0 0.0
  %134 = vmatprep.subr.mxu0 0.0
  %135 = vmatpush2.msra.mxu0 0.0
  %136 = vmatprep.mubr.f32.mxu0 0.0
  %137 = vmatmul.mubr.f32.gmra.mxu0 %v26
  %v138 = vpop.f32.mrf.mxu0
  %v139 = vadd.f32 %v65, %v138
  %v140 = vpop.f32.mrf.mxu0
  %v141 = vadd.f32 %v69, %v140
  %142 = vmatprep.mubr.f32.mxu0 0.0
  %143 = vmatmul.mubr.f32.gmra.mxu0 %v27
  %v144 = vpop.f32.mrf.mxu0
  %v145 = vadd.f32 %v65, %v144
  %v146 = vpop.f32.mrf.mxu0
  %v147 = vadd.f32 %v69, %v146
  %148 = vdwg.mxu0
  %v149 = vmax.f32 %v139, 0.0
  %v150 = vmax.f32 %v141, 0.0
  %v151 = vmax.f32 %v145, 0.0
  %v152 = vmax.f32 %v147, 0.0
  %v153 = vld [vmem:[%s3] sm:$0xff]
  %v154 = vld [vmem:[%s3 + $0x8] sm:$0xff]
  %v155 = vld [vmem:[%s3 + $0x10] sm:$0xff]
  %v156 = vld [vmem:[%s3 + $0x18] sm:$0xff]
  %v157 = vld [vmem:[%s3 + $0x20] sm:$0xff]
  %v158 = vld [vmem:[%s3 + $0x28] sm:$0xff]
  %v159 = vld [vmem:[%s3 + $0x30] sm:$0xff]
  %v160 = vld [vmem:[%s3 + $0x38] sm:$0xff]
  %v161 = vld [vmem:[%s3 + $0x40] sm:$0xff]
  %v162 = vld [vmem:[%s3 + $0x48] sm:$0xff]
  %v163 = vld [vmem:[%s3 + $0x50] sm:$0xff]
  %v164 = vld [vmem:[%s3 + $0x58] sm:$0xff]
  %v165 = vld [vmem:[%s3 + $0x60] sm:$0xff]
  %v166 = vld [vmem:[%s3 + $0x68] sm:$0xff]
  %v167 = vld [vmem:[%s3 + $0x70] sm:$0xff]
  %v168 = vld [vmem:[%s3 + $0x78] sm:$0xff]
  %v169 = vld [vmem:[%s3 + $0x80] sm:$0xff]
  %v170 = vld [vmem:[%s3 + $0x88] sm:$0xff]
  %v171 = vld [vmem:[%s3 + $0x90] sm:$0xff]
  %v172 = vld [vmem:[%s3 + $0x98] sm:$0xff]
  %v173 = vld [vmem:[%s3 + $0xa0] sm:$0xff]
  %v174 = vld [vmem:[%s3 + $0xa8] sm:$0xff]
  %v175 = vld [vmem:[%s3 + $0xb0] sm:$0xff]
  %v176 = vld [vmem:[%s3 + $0xb8] sm:$0xff]
  %v177 = vld [vmem:[%s4] sm:$0x1]
  %v179 = vlaneseq
  %v180 = vshrl.u32 %v179, 7
  %v181 = vsub.s32 0, %v180
  %v182 = vrot.slane %v177, %v181
  %vm184 = vcmask 523264
  %v186 = vsel %vm184, %v150, 0
  %v189 = vsel %vm184, %v152, 0
  %191 = vmatprep.subr.mxu0 0.0
  %192 = vmatpush1.msra.mxu0 %v168
  %193 = vmatprep.subr.mxu0 0.0
  %194 = vmatpush1.msra.mxu0 %v167
  %195 = vmatprep.subr.mxu0 0.0
  %196 = vmatpush1.msra.mxu0 %v166
  %197 = vmatprep.subr.mxu0 0.0
  %198 = vmatpush1.msra.mxu0 %v165
  %199 = vmatprep.subr.mxu0 0.0
  %200 = vmatpush1.msra.mxu0 %v164
  %201 = vmatprep.subr.mxu0 0.0
  %202 = vmatpush1.msra.mxu0 %v163
  %203 = vmatprep.subr.mxu0 0.0
  %204 = vmatpush1.msra.mxu0 %v162
  %205 = vmatprep.subr.mxu0 0.0
  %206 = vmatpush1.msra.mxu0 %v161
  %207 = vmatprep.subr.mxu0 0.0
  %208 = vmatpush1.msra.mxu0 %v160
  %209 = vmatprep.subr.mxu0 0.0
  %210 = vmatpush1.msra.mxu0 %v159
  %211 = vmatprep.subr.mxu0 0.0
  %212 = vmatpush1.msra.mxu0 %v158
  %213 = vmatprep.subr.mxu0 0.0
  %214 = vmatpush1.msra.mxu0 %v157
  %215 = vmatprep.subr.mxu0 0.0
  %216 = vmatpush1.msra.mxu0 %v156
  %217 = vmatprep.subr.mxu0 0.0
  %218 = vmatpush1.msra.mxu0 %v155
  %219 = vmatprep.subr.mxu0 0.0
  %220 = vmatpush1.msra.mxu0 %v154
  %221 = vmatprep.subr.mxu0 0.0
  %222 = vmatpush1.msra.mxu0 %v153
  %223 = vmatprep.subr.mxu0 0.0
  %224 = vmatpush2.msra.mxu0 0.0
  %225 = vmatprep.subr.mxu0 0.0
  %226 = vmatpush2.msra.mxu0 0.0
  %227 = vmatprep.subr.mxu0 0.0
  %228 = vmatpush2.msra.mxu0 0.0
  %229 = vmatprep.subr.mxu0 0.0
  %230 = vmatpush2.msra.mxu0 0.0
  %231 = vmatprep.subr.mxu0 0.0
  %232 = vmatpush2.msra.mxu0 0.0
  %233 = vmatprep.subr.mxu0 0.0
  %234 = vmatpush2.msra.mxu0 0.0
  %235 = vmatprep.subr.mxu0 0.0
  %236 = vmatpush2.msra.mxu0 0.0
  %237 = vmatprep.subr.mxu0 0.0
  %238 = vmatpush2.msra.mxu0 0.0
  %239 = vmatprep.subr.mxu0 0.0
  %240 = vmatpush2.msra.mxu0 %v176
  %241 = vmatprep.subr.mxu0 0.0
  %242 = vmatpush2.msra.mxu0 %v175
  %243 = vmatprep.subr.mxu0 0.0
  %244 = vmatpush2.msra.mxu0 %v174
  %245 = vmatprep.subr.mxu0 0.0
  %246 = vmatpush2.msra.mxu0 %v173
  %247 = vmatprep.subr.mxu0 0.0
  %248 = vmatpush2.msra.mxu0 %v172
  %249 = vmatprep.subr.mxu0 0.0
  %250 = vmatpush2.msra.mxu0 %v171
  %251 = vmatprep.subr.mxu0 0.0
  %252 = vmatpush2.msra.mxu0 %v170
  %253 = vmatprep.subr.mxu0 0.0
  %254 = vmatpush2.msra.mxu0 %v169
  %255 = vmatprep.mubr.f32.mxu0 %v186
  %256 = vmatmul.mubr.f32.gmra.mxu0 %v149
  %v257 = vpop.f32.mrf.mxu0
  %v258 = vadd.f32 %v182, %v257
  %v259 = vpop.f32.mrf.mxu0
  %260 = vmatprep.mubr.f32.mxu0 %v189
  %261 = vmatmul.mubr.f32.gmra.mxu0 %v151
  %v262 = vpop.f32.mrf.mxu0
  %v263 = vadd.f32 %v182, %v262
  %v264 = vpop.f32.mrf.mxu0
  %265 = vdwg.mxu0
  %v266 = vmax.f32 %v258, 0.0
  %v267 = vmax.f32 %v263, 0.0
  %v268 = vld [vmem:[%s5] sm:$0xff]
  %v269 = vld [vmem:[%s5 + $0x8] sm:$0xff]
  %v270 = vld [vmem:[%s5 + $0x10] sm:$0xff]
  %v271 = vld [vmem:[%s5 + $0x18] sm:$0xff]
  %v272 = vld [vmem:[%s5 + $0x20] sm:$0xff]
  %v273 = vld [vmem:[%s5 + $0x28] sm:$0xff]
  %v274 = vld [vmem:[%s5 + $0x30] sm:$0xff]
  %v275 = vld [vmem:[%s5 + $0x38] sm:$0xff]
  %v276 = vld [vmem:[%s5 + $0x40] sm:$0xff]
  %v277 = vld [vmem:[%s5 + $0x48] sm:$0xff]
  %v278 = vld [vmem:[%s5 + $0x50] sm:$0xff]
  %v279 = vld [vmem:[%s5 + $0x58] sm:$0xff]
  %v280 = vld [vmem:[%s5 + $0x60] sm:$0xff]
  %v281 = vld [vmem:[%s5 + $0x68] sm:$0xff]
  %v282 = vld [vmem:[%s5 + $0x70] sm:$0xff]
  %v283 = vld [vmem:[%s5 + $0x78] sm:$0xff]
  %v284 = vld [vmem:[%s6] sm:$0x1]
  %v286 = vlaneseq
  %v287 = vshrl.u32 %v286, 7
  %v288 = vsub.s32 0, %v287
  %v289 = vrot.slane %v284, %v288
  %291 = vmatprep.subr.mxu0 0.0
  %292 = vmatpush1.msra.mxu0 %v283
  %293 = vmatprep.subr.mxu0 0.0
  %294 = vmatpush1.msra.mxu0 %v282
  %295 = vmatprep.subr.mxu0 0.0
  %296 = vmatpush1.msra.mxu0 %v281
  %297 = vmatprep.subr.mxu0 0.0
  %298 = vmatpush1.msra.mxu0 %v280
  %299 = vmatprep.subr.mxu0 0.0
  %300 = vmatpush1.msra.mxu0 %v279
  %301 = vmatprep.subr.mxu0 0.0
  %302 = vmatpush1.msra.mxu0 %v278
  %303 = vmatprep.subr.mxu0 0.0
  %304 = vmatpush1.msra.mxu0 %v277
  %305 = vmatprep.subr.mxu0 0.0
  %306 = vmatpush1.msra.mxu0 %v276
  %307 = vmatprep.subr.mxu0 0.0
  %308 = vmatpush1.msra.mxu0 %v275
  %309 = vmatprep.subr.mxu0 0.0
  %310 = vmatpush1.msra.mxu0 %v274
  %311 = vmatprep.subr.mxu0 0.0
  %312 = vmatpush1.msra.mxu0 %v273
  %313 = vmatprep.subr.mxu0 0.0
  %314 = vmatpush1.msra.mxu0 %v272
  %315 = vmatprep.subr.mxu0 0.0
  %316 = vmatpush1.msra.mxu0 %v271
  %317 = vmatprep.subr.mxu0 0.0
  %318 = vmatpush1.msra.mxu0 %v270
  %319 = vmatprep.subr.mxu0 0.0
  %320 = vmatpush1.msra.mxu0 %v269
  %321 = vmatprep.subr.mxu0 0.0
  %322 = vmatpush1.msra.mxu0 %v268
  %323 = vmatprep.subr.mxu0 0.0
  %324 = vmatpush2.msra.mxu0 0.0
  %325 = vmatprep.subr.mxu0 0.0
  %326 = vmatpush2.msra.mxu0 0.0
  %327 = vmatprep.subr.mxu0 0.0
  %328 = vmatpush2.msra.mxu0 0.0
  %329 = vmatprep.subr.mxu0 0.0
  %330 = vmatpush2.msra.mxu0 0.0
  %331 = vmatprep.subr.mxu0 0.0
  %332 = vmatpush2.msra.mxu0 0.0
  %333 = vmatprep.subr.mxu0 0.0
  %334 = vmatpush2.msra.mxu0 0.0
  %335 = vmatprep.subr.mxu0 0.0
  %336 = vmatpush2.msra.mxu0 0.0
  %337 = vmatprep.subr.mxu0 0.0
  %338 = vmatpush2.msra.mxu0 0.0
  %339 = vmatprep.subr.mxu0 0.0
  %340 = vmatpush2.msra.mxu0 0.0
  %341 = vmatprep.subr.mxu0 0.0
  %342 = vmatpush2.msra.mxu0 0.0
  %343 = vmatprep.subr.mxu0 0.0
  %344 = vmatpush2.msra.mxu0 0.0
  %345 = vmatprep.subr.mxu0 0.0
  %346 = vmatpush2.msra.mxu0 0.0
  %347 = vmatprep.subr.mxu0 0.0
  %348 = vmatpush2.msra.mxu0 0.0
  %349 = vmatprep.subr.mxu0 0.0
  %350 = vmatpush2.msra.mxu0 0.0
  %351 = vmatprep.subr.mxu0 0.0
  %352 = vmatpush2.msra.mxu0 0.0
  %353 = vmatprep.subr.mxu0 0.0
  %354 = vmatpush2.msra.mxu0 0.0
  %355 = vmatprep.mubr.f32.mxu0 0.0
  %356 = vmatmul.mubr.f32.gmra.mxu0 %v266
  %v357 = vpop.f32.mrf.mxu0
  %v358 = vadd.f32 %v289, %v357
  %v359 = vpop.f32.mrf.mxu0
  %360 = vmatprep.mubr.f32.mxu0 0.0
  %361 = vmatmul.mubr.f32.gmra.mxu0 %v267
  %v362 = vpop.f32.mrf.mxu0
  %v363 = vadd.f32 %v289, %v362
  %v364 = vpop.f32.mrf.mxu0
  %365 = vdwg.mxu0
  %v366 = vsub.f32 0.0, %v358
  %v367 = vsub.f32 0.0, %v363
  %v368 = vmul.f32 %v366, 1.442695
  %v369 = vpow.pop %v368
  %v370 = vmul.f32 %v367, 1.442695
  %v371 = vpow.pop %v370
  %v372 = vadd.f32 %v369, 1.0
  %v373 = vadd.f32 %v371, 1.0
  %v374 = vrcp.pop %v372
  %v375 = vmul.f32 1.0, %v374
  %v376 = vrcp.pop %v373
  %v377 = vmul.f32 1.0, %v376
  %vm378 = vcmask 130048
  %379 = vst.msk [vmem:[%s7] sm:$0xff] %vm378, %v375
  %vm380 = vcmask 126976
  %381 = vst.msk [vmem:[%s7 + $0x8] sm:$0x1f] %vm380, %v377
  // Predicated region
  $region30: #{pima_forward.1} parent=0 // pred_check
    _
  $region31: #{pima_forward.1} parent=0 // pred_check_branch
    %383 = sbr.rel (0) target = $region33
  $region32: #{pima_forward.1} parent=0 // pred_region
    _
  $region33: #{pima_forward.1} parent=0 // pred_fallthru
    _
  // Predicated region
  $region34: #{pima_forward.1} parent=0 // pred_check
    _
  $region35: #{pima_forward.1} parent=0 // pred_check_branch
    %385 = sbr.rel (0) target = $region37
  $region36: #{pima_forward.1} parent=0 // pred_region
    _
  $region37: #{pima_forward.1} parent=0 // pred_fallthru
    _

</llo_original>
